<compile_context>
chip_gen: v7x
topology: tpu7x:2x2x1
jax: 0.10.0
libtpu: 0.0.40
codegen_flags: <defaults>
</compile_context>

<pallas_src>
import functools

import jax
import jax.numpy as jnp
from jax import lax
from jax.experimental import pallas as pl
from jax.experimental.pallas import tpu as pltpu

EPS = 1e-5
_LANE = 128
_TARGET_STEPS = 8            # >= 4 grid steps per TensorCore on a 2-TC (v7x) part
_MIN_TILE_BYTES = 1 << 20    # keep each in+out tile pair >= ~1 MiB (amortize ~0.35us/step)
_MAX_TILE_VMEM = 24 * 1024 * 1024


def _round_up(x, m):
    return ((x + m - 1) // m) * m


def _vmem_capacity_bytes():
    """Physical VMEM per TensorCore; conservative fallback = v7x (64 MiB)."""
    try:
        cap = int(pltpu.get_tpu_info().vmem_capacity_bytes)
        if cap > 0:
            return cap
    except Exception:
        pass
    return 64 * 1024 * 1024


def _choose_row_tile(rows, feat, itemsize, vmem_cap, n_buf):
    """Sublane-aligned row tile that fits the VMEM budget (I/O buffers plus
    f32 temporaries) and leaves enough grid steps for pipelining / megacore."""
    pack = max(8, 32 // itemsize)            # 8 rows f32, 16 bf16, 32 int8/fp8
    rows_up = _round_up(rows, pack)

    # VMEM per tile row: n_buf input buffers + 2 output buffers in the I/O
    # dtype, plus ~3 f32-wide in-kernel temporaries (x_f32, x*x / xc, y).
    per_row = (n_buf + 2) * feat * itemsize + 3 * 4 * feat
    budget = min(vmem_cap // 4, _MAX_TILE_VMEM)
    tm_vmem = max(pack, budget // max(per_row, 1))

    tm_steps = max(pack, rows_up // _TARGET_STEPS)                        # want >= 8 steps
    tm_floor = max(pack, _MIN_TILE_BYTES // max(2 * feat * itemsize, 1))  # but not tiny tiles
    tm = max(tm_steps, tm_floor)
    tm = min(tm, tm_vmem, 2048, rows_up)
    return max(pack, (tm // pack) * pack)


def _ln_kernel(x_ref, p_ref, o_ref, *, two_pass):
    # General path. x_ref: (tm, D); p_ref: (2, D) = [weight; bias]; o_ref: (tm, D).
    x = x_ref[...].astype(jnp.float32)
    w = p_ref[0:1, :].astype(jnp.float32)
    b = p_ref[1:2, :].astype(jnp.float32)
    if two_pass:
        # Cancellation-safe fallback (two passes over the tile).
        mean = jnp.mean(x, axis=-1, keepdims=True)
        xc = x - mean
        var = jnp.mean(xc * xc, axis=-1, keepdims=True)
        y = xc * lax.rsqrt(var + EPS)
    else:
        # Fused single pass: sum(x) and sum(x*x) together; var = E[x^2]-mean^2
        # (fine for normalized activations; gate with two_pass=True otherwise).
        mean = jnp.mean(x, axis=-1, keepdims=True)
        ex2 = jnp.mean(x * x, axis=-1, keepdims=True)
        var = ex2 - mean * mean
        y = (x - mean) * lax.rsqrt(var + EPS)
    o_ref[...] = (y * w + b).astype(o_ref.dtype)


def _ln_folded_kernel(x_ref, p_ref, a_ref, o_ref):
    # Lane-dense small-D path.  Each tile row packs k = 128//D independent
    # LayerNorm rows along the lane axis.  a_ref is the (k*D, k*D)
    # block-diagonal averaging matrix (1/D inside each DxD diagonal block),
    # so x @ a gives the per-group mean already broadcast back to every lane.
    x = x_ref[...].astype(jnp.float32)
    a = a_ref[...]
    mean = jnp.dot(x, a, precision=lax.Precision.HIGHEST,
                   preferred_element_type=jnp.float32)
    ex2 = jnp.dot(x * x, a, precision=lax.Precision.HIGHEST,
                  preferred_element_type=jnp.float32)
    var = ex2 - mean * mean
    w = p_ref[0:1, :].astype(jnp.float32)
    b = p_ref[1:2, :].astype(jnp.float32)
    y = (x - mean) * lax.rsqrt(var + EPS) * w + b
    o_ref[...] = y.astype(o_ref.dtype)


@functools.partial(jax.jit, static_argnames=("block_rows", "two_pass"))
def layer_norm_pallas(x, weight, bias=None, *, block_rows=None, two_pass=False):
    """LayerNorm over the last dim of x, matching torch F.layer_norm(eps=1e-5).

    HBM-bandwidth bound on every TPU generation: prefer bf16 inputs at the
    call site when the model tolerates it (halves bytes moved); math is f32.
    """
    orig_shape = x.shape
    ndim = orig_shape[-1]
    assert weight.shape == (ndim,)

    rows = 1
    for d in orig_shape[:-1]:
        rows *= int(d)
    x2 = x.reshape(rows, ndim)

    b_vec = bias if bias is not None else jnp.zeros((ndim,), dtype=weight.dtype)

    # Lane-dense small-D path: fold k = 128//ndim consecutive rows into the
    # lane axis ((rows, D) -> (rows/k, 128) is a pure metadata reshape of
    # contiguous memory) so stores are full-width instead of masked partial
    # stores and all 128 VPU lanes do useful work.
    fold = 1
    if (not two_pass) and ndim < _LANE and _LANE % ndim == 0:
        k = _LANE // ndim
        if rows % k == 0 and rows >= k:
            fold = k
    # TODO(synk): ndim that does not divide 128 (or row counts not divisible
    # by the fold factor) still take the masked-store general path below.

    feat = ndim * fold
    rows_f = rows // fold
    if fold > 1:
        x2 = x2.reshape(rows_f, feat)

    # Weight + bias packed into one resident (2, feat) param DMA.
    params = jnp.stack([jnp.tile(weight, fold), jnp.tile(b_vec, fold)])

    itemsize = jnp.dtype(x.dtype).itemsize
    vmem_cap = _vmem_capacity_bytes()
    # 128 MiB parts (v5e/v6e): spend spare VMEM on a deeper input pipeline.
    # 64 MiB parts (v7x): stay double-buffered with a tighter tile budget.
    deep_buffer = vmem_cap >= 100 * 1024 * 1024
    n_buf = 3 if deep_buffer else 2

    tm = block_rows if block_rows is not None else _choose_row_tile(
        rows_f, feat, itemsize, vmem_cap, n_buf)
    grid = (pl.cdiv(rows_f, tm),)

    if deep_buffer:
        row_in_spec = pl.BlockSpec((tm, feat), lambda i: (i, 0),
                                   pipeline_mode=pl.Buffered(n_buf))
    else:
        row_in_spec = pl.BlockSpec((tm, feat), lambda i: (i, 0))
    row_out_spec = pl.BlockSpec((tm, feat), lambda i: (i, 0))
    param_spec = pl.BlockSpec((2, feat), lambda i: (0, 0))

    param_bytes = 2 * feat * jnp.dtype(params.dtype).itemsize
    matmul_flops = 2 * 2 * rows_f * feat * feat if fold > 1 else 0
    cost = pl.CostEstimate(
        flops=int(10 * rows * ndim + matmul_flops),
        transcendentals=int(rows),
        bytes_accessed=int(2 * rows * ndim * itemsize + param_bytes),
    )

    if fold > 1:
        gid = jnp.arange(feat, dtype=jnp.int32) // ndim
        avg = (gid[:, None] == gid[None, :]).astype(jnp.float32) / float(ndim)
        kernel = _ln_folded_kernel
        in_specs = [row_in_spec, param_spec,
                    pl.BlockSpec((feat, feat), lambda i: (0, 0))]
        args = (x2, params, avg)
    else:
        kernel = functools.partial(_ln_kernel, two_pass=two_pass)
        in_specs = [row_in_spec, param_spec]
        args = (x2, params)

    out2 = pl.pallas_call(
        kernel,
        out_shape=jax.ShapeDtypeStruct((rows_f, feat), x.dtype),
        grid_spec=pl.GridSpec(grid=grid, in_specs=in_specs,
                              out_specs=row_out_spec),
        compiler_params=pltpu.CompilerParams(
            # Rows are fully independent; "parallel" lets the runtime shard
            # the row axis across both TensorCores of a v7x megacore.
            dimension_semantics=("parallel",),
            vmem_limit_bytes=min(int(vmem_cap * 0.85), 64 * 1024 * 1024),
        ),
        cost_estimate=cost,
    )(*args)

    return out2.reshape(orig_shape)


def _reference_layernorm(x, weight, bias):
    xf = x.astype(jnp.float32)
    mean = jnp.mean(xf, axis=-1, keepdims=True)
    var = jnp.mean((xf - mean) ** 2, axis=-1, keepdims=True)
    y = (xf - mean) / jnp.sqrt(var + EPS) * weight.astype(jnp.float32)
    if bias is not None:
        y = y + bias.astype(jnp.float32)
    return y.astype(x.dtype)


if __name__ == "__main__":
    key = jax.random.PRNGKey(0)
    k1, k2, k3 = jax.random.split(key, 3)

    # Shapes implied by the ACT-VAE usage: (batch, seq, hidden)
    batch, seq, hidden = 2, 8, 32
    x = jax.random.normal(k1, (batch, seq, hidden), dtype=jnp.float32)

    # Deterministic parameter init matching nn.Parameter(torch.ones/zeros(ndim))
    weight = jnp.ones((hidden,), dtype=jnp.float32)
    bias = jnp.zeros((hidden,), dtype=jnp.float32)

    # bias=True case (lane-dense folded path: 4 rows of D=32 per 128-lane slab)
    out = jax.block_until_ready(layer_norm_pallas(x, weight, bias))
    ref = _reference_layernorm(x, weight, bias)
    assert jnp.allclose(out, ref, atol=1e-5, rtol=1e-5), "bias=True mismatch"

    # bias=False case (LayerNorm(ndim, bias=False))
    out_nb = jax.block_until_ready(layer_norm_pallas(x, weight, None))
    ref_nb = _reference_layernorm(x, weight, None)
    assert jnp.allclose(out_nb, ref_nb, atol=1e-5, rtol=1e-5), "bias=False mismatch"

    # Ragged row count (rows=15, not divisible by the fold factor) exercises
    # the general kernel, the cdiv grid and the masked tail, with non-trivial
    # weight/bias.
    x_r = jax.random.normal(k2, (3, 5, hidden), dtype=jnp.float32)
    w_r = 1.0 + 0.1 * jax.random.normal(k3, (hidden,), dtype=jnp.float32)
    b_r = 0.1 * jax.random.normal(k3, (hidden,), dtype=jnp.float32)
    out_r = jax.block_until_ready(layer_norm_pallas(x_r, w_r, b_r))
    ref_r = _reference_layernorm(x_r, w_r, b_r)
    assert jnp.allclose(out_r, ref_r, atol=1e-5, rtol=1e-5), "ragged-rows mismatch"

    # Explicit two-pass variance fallback (same result, cancellation-safe math).
    out_tp = jax.block_until_ready(layer_norm_pallas(x_r, w_r, b_r, two_pass=True))
    assert jnp.allclose(out_tp, ref_r, atol=1e-5, rtol=1e-5), "two-pass mismatch"

    # bf16 I/O (f32 math inside the kernel, half the HBM bytes moved)
    x_bf = x.astype(jnp.bfloat16)
    out_bf = jax.block_until_ready(layer_norm_pallas(x_bf, weight, bias))
    ref_bf = _reference_layernorm(x_bf, weight, bias)
    assert jnp.allclose(out_bf.astype(jnp.float32), ref_bf.astype(jnp.float32),
                        atol=2e-2, rtol=2e-2), "bf16 mismatch"

    print("KERNEL_OK")
</pallas_src>

<mosaic_0001>
module attributes {stable_mosaic.version = 11 : i64} {
  func.func @_ln_folded_kernel(%arg0: i32, %arg1: memref<8x128xf32, #tpu.memory_space<vmem>>, %arg2: memref<2x128xf32, #tpu.memory_space<vmem>>, %arg3: memref<128x128xf32, #tpu.memory_space<vmem>>, %arg4: memref<8x128xf32, #tpu.memory_space<vmem>>) attributes {dimension_semantics = [#tpu.dimension_semantics<parallel>], iteration_bounds = array<i64: 1>, scalar_prefetch = 0 : i64, scratch_operands = 0 : i64, tpu.core_type = #tpu.core_type<tc>, window_params = [{transform_indices = @transform_0, window_bounds = array<i64: 8, 128>}, {pipeline_mode = #tpu.pipeline_mode<synchronous>, transform_indices = @transform_1, window_bounds = array<i64: 2, 128>}, {pipeline_mode = #tpu.pipeline_mode<synchronous>, transform_indices = @transform_2, window_bounds = array<i64: 128, 128>}, {transform_indices = @transform_3, window_bounds = array<i64: 8, 128>}]} {
    %c0 = arith.constant 0 : index
    %c0_0 = arith.constant 0 : index
    %0 = vector.load %arg1[%c0, %c0_0] : memref<8x128xf32, #tpu.memory_space<vmem>>, vector<8x128xf32>
    %c0_1 = arith.constant 0 : index
    %c0_2 = arith.constant 0 : index
    %1 = vector.load %arg3[%c0_1, %c0_2] : memref<128x128xf32, #tpu.memory_space<vmem>>, vector<128x128xf32>
    %cst = arith.constant dense<0.000000e+00> : vector<8x128xf32>
    %2 = tpu.matmul %0, %1, %cst {dimension_numbers = #tpu.dot_dimension_numbers<[1], [0], [0], [1], [0, 0, 1, 1], [], []>, precision = #tpu.contract_precision<fp32>} : vector<8x128xf32>, vector<128x128xf32>, vector<8x128xf32> -> vector<8x128xf32>
    %3 = arith.mulf %0, %0 : vector<8x128xf32>
    %cst_3 = arith.constant dense<0.000000e+00> : vector<8x128xf32>
    %4 = tpu.matmul %3, %1, %cst_3 {dimension_numbers = #tpu.dot_dimension_numbers<[1], [0], [0], [1], [0, 0, 1, 1], [], []>, precision = #tpu.contract_precision<fp32>} : vector<8x128xf32>, vector<128x128xf32>, vector<8x128xf32> -> vector<8x128xf32>
    %5 = arith.mulf %2, %2 : vector<8x128xf32>
    %6 = arith.subf %4, %5 : vector<8x128xf32>
    %c0_4 = arith.constant 0 : index
    %c0_5 = arith.constant 0 : index
    %7 = vector.load %arg2[%c0_4, %c0_5] : memref<2x128xf32, #tpu.memory_space<vmem>>, vector<1x128xf32>
    %c1 = arith.constant 1 : index
    %c0_6 = arith.constant 0 : index
    %8 = vector.load %arg2[%c1, %c0_6] : memref<2x128xf32, #tpu.memory_space<vmem>>, vector<1x128xf32>
    %9 = arith.subf %0, %2 : vector<8x128xf32>
    %cst_7 = arith.constant 9.99999974E-6 : f32
    %10 = vector.broadcast %cst_7 : f32 to vector<8x128xf32>
    %11 = arith.addf %6, %10 : vector<8x128xf32>
    %12 = math.rsqrt %11 : vector<8x128xf32>
    %13 = arith.mulf %9, %12 : vector<8x128xf32>
    %14 = vector.broadcast %7 : vector<1x128xf32> to vector<8x128xf32>
    %15 = arith.mulf %13, %14 : vector<8x128xf32>
    %16 = vector.broadcast %8 : vector<1x128xf32> to vector<8x128xf32>
    %17 = arith.addf %15, %16 : vector<8x128xf32>
    %c0_8 = arith.constant 0 : index
    %c0_9 = arith.constant 0 : index
    %18 = vector.load %arg4[%c0_8, %c0_9] : memref<8x128xf32, #tpu.memory_space<vmem>>, vector<8x128xf32>
    tpu.vector_store %arg4[%c0_8, %c0_9], %17 {strides = array<i32>} : memref<8x128xf32, #tpu.memory_space<vmem>>, vector<8x128xf32>,
    return
  }
  func.func @transform_0(%arg0: i32) -> (i32, i32) {
    %c0_i32 = arith.constant 0 : i32
    %c0_i32_0 = arith.constant 0 : i32
    return %arg0, %c0_i32 : i32, i32
  }
  func.func @transform_1(%arg0: i32) -> (i32, i32) {
    %c0_i32 = arith.constant 0 : i32
    %c0_i32_0 = arith.constant 0 : i32
    %c0_i32_1 = arith.constant 0 : i32
    return %c0_i32, %c0_i32_0 : i32, i32
  }
  func.func @transform_2(%arg0: i32) -> (i32, i32) {
    %c0_i32 = arith.constant 0 : i32
    %c0_i32_0 = arith.constant 0 : i32
    %c0_i32_1 = arith.constant 0 : i32
    return %c0_i32, %c0_i32_0 : i32, i32
  }
  func.func @transform_3(%arg0: i32) -> (i32, i32) {
    %c0_i32 = arith.constant 0 : i32
    %c0_i32_0 = arith.constant 0 : i32
    return %arg0, %c0_i32 : i32, i32
  }
}

</mosaic_0001>

<llo_original>
// kernel: tile.18
$region0: #{tile.18}
  %s0 = inlined_call_operand.vmem [shape: f32[4,32], index: 0, kind: input, shape index: {}]
  %s1 = inlined_call_operand.vmem [shape: f32[1,128], index: 1, kind: output, shape index: {}]
  $region1: #{tile.18} parent=0
    #allocation0 [shape = 'u8[4096]{0}', space=vmem, size = 0x1000, scoped, tag = 'scoped mem for output reshape']
    #allocation1 [shape = 'u8[4096]{0}', space=vmem, size = 0x1000, scoped, tag = 'scoped mem for input reshape']
    %s3 = sshllo.u32 0, 4
    %v4 = vld [vmem:[%s0] sm:%s3]
    %5 = vst [vmem:[#allocation1] sm:%s3] %v4
    %v6 = vld [vmem:[#allocation1] sm:$0x1]
    %vm7 = vcmask 261120
    %8 = vst.msk [vmem:[#allocation0] sm:$0x1] %vm7, %v6
    %s9 = scalar_lea.vmem [#allocation1], 3
    %v10 = vld [vmem:[%s9] sm:$0x1]
    %11 = vrot.lane.b32.xlu0 %v10, 96
    %v12 = vpop.permute.xlu0 %11
    %vm13 = vcmask 1048320
    %14 = vst.msk [vmem:[#allocation0] sm:$0x1] %vm13, %v12
    %s15 = scalar_lea.vmem [#allocation1], 2
    %v16 = vld [vmem:[%s15] sm:$0x1]
    %17 = vrot.lane.b32.xlu0 %v16, 64
    %v18 = vpop.permute.xlu0 %17
    %vm19 = vcmask 785920
    %20 = vst.msk [vmem:[#allocation0] sm:$0x1] %vm19, %v18
    %s21 = scalar_lea.vmem [#allocation1], 1
    %v22 = vld [vmem:[%s21] sm:$0x1]
    %23 = vrot.lane.b32.xlu0 %v22, 32
    %v24 = vpop.permute.xlu0 %23
    %vm25 = vcmask 523520
    %26 = vst.msk [vmem:[#allocation0] sm:$0x1] %vm25, %v24
    %s28 = sshllo.u32 0, 1
    %v30 = vld [vmem:[#allocation0] sm:%s28]
    %s31 = sshllo.u32 0, 1
    %32 = vst [vmem:[%s1] sm:%s31] %v30

// kernel: tile.13
$region0: #{tile.13}
  #allocation0 [shape = 's32[1]{0}', space=sflag, size = 0x4, scoped, tag = 'scoped memory for tile.13']
  %s0 = inlined_call_operand.vmem [shape: f32[32], index: 0, kind: input, shape index: {}]
  %s1 = inlined_call_operand.vmem [shape: f32[4,32], index: 1, kind: output, shape index: {}]
  // Predicated region
  $region2: #{tile.13} parent=0 // pred_check
    _
  $region3: #{tile.13} parent=0 // pred_check_branch
    %3 = sbr.rel (0) target = $region5
  $region4: #{tile.13} parent=0 // pred_region
    _
  $region5: #{tile.13} parent=0 // pred_fallthru
    _
  %v4 = vld [vmem:[%s0] ss:$0 sm:$0xff]
  %5 = vst [vmem:[%s1] sm:$0xf] %v4

// kernel: layer_norm_pallas.1
$region0: #{layer_norm_pallas.1}
  #allocation0 [shape = 'u32[]', space=smem, size = 0x4, offset = 0x4, fixed_abs, tag = 'smem constant byte address 0x4 - core index']
  #allocation1 [shape = 'u32[144,128]{1,0:T(1,128)}', space=vmem, size = 0x12000, scoped, tag = 'internal scratch']
  %s0 = inlined_call_operand.vmem [shape: f32[4,128], index: 0, kind: input, shape index: {}]
  %s1 = inlined_call_operand.vmem [shape: f32[2,128], index: 1, kind: input, shape index: {}]
  %s2 = inlined_call_operand.vmem [shape: f32[128,128], index: 2, kind: input, shape index: {}]
  %s3 = inlined_call_operand.vmem [shape: f32[4,128], index: 3, kind: output, shape index: {}]
  %s4 = sld [smem:[#allocation0]]
  $region52: #{layer_norm_pallas.1} parent=0
    _
  %s6 = ssub.s32 1, %s4
  %s7 = scalar_select 0, %s6, %s4
  $region1: #{layer_norm_pallas.1} parent=0
    #allocation2 [shape = 'u8[4096]{0}', space=vmem, size = 0x1000, scoped, tag = 'output window, operand 0, single buffered']
    // Predicated region
    $region2: #{layer_norm_pallas.1} parent=1 // pred_check
      _
    $region3: #{layer_norm_pallas.1} parent=1 // pred_check_branch
      %9 = sbr.rel (0) target = $region5
    $region4: #{layer_norm_pallas.1} parent=1 // pred_region
      _
    $region5: #{layer_norm_pallas.1} parent=1 // pred_fallthru
      _
    // Predicated region
    $region6: #{layer_norm_pallas.1} parent=1 // pred_check
      _
    $region7: #{layer_norm_pallas.1} parent=1 // pred_check_branch
      %11 = sbr.rel (0) target = $region9
    $region8: #{layer_norm_pallas.1} parent=1 // pred_region
      _
    $region9: #{layer_norm_pallas.1} parent=1 // pred_fallthru
      _
    // Predicated region
    $region10: #{layer_norm_pallas.1} parent=1 // pred_check
      _
    $region11: #{layer_norm_pallas.1} parent=1 // pred_check_branch
      %13 = sbr.rel (0) target = $region13
    $region12: #{layer_norm_pallas.1} parent=1 // pred_region
      _
    $region13: #{layer_norm_pallas.1} parent=1 // pred_fallthru
      _
    %v14 = vld [vmem:[%s0] sm:$0xff]
    %v15 = vld [vmem:[%s2] sm:$0xff]
    %v16 = vld [vmem:[%s2 + $0x8] sm:$0xff]
    %v17 = vld [vmem:[%s2 + $0x10] sm:$0xff]
    %v18 = vld [vmem:[%s2 + $0x18] sm:$0xff]
    %v19 = vld [vmem:[%s2 + $0x20] sm:$0xff]
    %v20 = vld [vmem:[%s2 + $0x28] sm:$0xff]
    %v21 = vld [vmem:[%s2 + $0x30] sm:$0xff]
    %v22 = vld [vmem:[%s2 + $0x38] sm:$0xff]
    %v23 = vld [vmem:[%s2 + $0x40] sm:$0xff]
    %v24 = vld [vmem:[%s2 + $0x48] sm:$0xff]
    %v25 = vld [vmem:[%s2 + $0x50] sm:$0xff]
    %v26 = vld [vmem:[%s2 + $0x58] sm:$0xff]
    %v27 = vld [vmem:[%s2 + $0x60] sm:$0xff]
    %v28 = vld [vmem:[%s2 + $0x68] sm:$0xff]
    %v29 = vld [vmem:[%s2 + $0x70] sm:$0xff]
    %v30 = vld [vmem:[%s2 + $0x78] sm:$0xff]
    %31 = vmatprep.subr.mxu0 0.0
    %v32 = vand.u32 %v15, 4294901760
    %33 = vmatpush1.msra.mxu0 %v32
    %34 = vmatprep.subr.mxu0 0.0
    %v35 = vand.u32 %v16, 4294901760
    %36 = vmatpush1.msra.mxu0 %v35
    %37 = vmatprep.subr.mxu0 0.0
    %v38 = vand.u32 %v17, 4294901760
    %39 = vmatpush1.msra.mxu0 %v38
    %40 = vmatprep.subr.mxu0 0.0
    %v41 = vand.u32 %v18, 4294901760
    %42 = vmatpush1.msra.mxu0 %v41
    %43 = vmatprep.subr.mxu0 0.0
    %v44 = vand.u32 %v19, 4294901760
    %45 = vmatpush1.msra.mxu0 %v44
    %46 = vmatprep.subr.mxu0 0.0
    %v47 = vand.u32 %v20, 4294901760
    %48 = vmatpush1.msra.mxu0 %v47
    %49 = vmatprep.subr.mxu0 0.0
    %v50 = vand.u32 %v21, 4294901760
    %51 = vmatpush1.msra.mxu0 %v50
    %52 = vmatprep.subr.mxu0 0.0
    %v53 = vand.u32 %v22, 4294901760
    %54 = vmatpush1.msra.mxu0 %v53
    %55 = vmatprep.subr.mxu0 0.0
    %v56 = vand.u32 %v23, 4294901760
    %57 = vmatpush1.msra.mxu0 %v56
    %58 = vmatprep.subr.mxu0 0.0
    %v59 = vand.u32 %v24, 4294901760
    %60 = vmatpush1.msra.mxu0 %v59
    %61 = vmatprep.subr.mxu0 0.0
    %v62 = vand.u32 %v25, 4294901760
    %63 = vmatpush1.msra.mxu0 %v62
    %64 = vmatprep.subr.mxu0 0.0
    %v65 = vand.u32 %v26, 4294901760
    %66 = vmatpush1.msra.mxu0 %v65
    %67 = vmatprep.subr.mxu0 0.0
    %v68 = vand.u32 %v27, 4294901760
    %69 = vmatpush1.msra.mxu0 %v68
    %70 = vmatprep.subr.mxu0 0.0
    %v71 = vand.u32 %v28, 4294901760
    %72 = vmatpush1.msra.mxu0 %v71
    %73 = vmatprep.subr.mxu0 0.0
    %v74 = vand.u32 %v29, 4294901760
    %75 = vmatpush1.msra.mxu0 %v74
    %76 = vmatprep.subr.mxu0 0.0
    %v77 = vand.u32 %v30, 4294901760
    %78 = vmatpush1.msra.mxu0 %v77
    %79 = vmatprep.subr.mxu0 0.0
    %80 = vmatpush1.msra.mxu0 0.0
    %81 = vmatprep.subr.mxu0 0.0
    %82 = vmatpush1.msra.mxu0 0.0
    %83 = vmatprep.subr.mxu0 0.0
    %84 = vmatpush1.msra.mxu0 0.0
    %85 = vmatprep.subr.mxu0 0.0
    %86 = vmatpush1.msra.mxu0 0.0
    %87 = vmatprep.subr.mxu0 0.0
    %88 = vmatpush1.msra.mxu0 0.0
    %89 = vmatprep.subr.mxu0 0.0
    %90 = vmatpush1.msra.mxu0 0.0
    %91 = vmatprep.subr.mxu0 0.0
    %92 = vmatpush1.msra.mxu0 0.0
    %93 = vmatprep.subr.mxu0 0.0
    %94 = vmatpush1.msra.mxu0 0.0
    %95 = vmatprep.subr.mxu0 0.0
    %96 = vmatpush1.msra.mxu0 0.0
    %97 = vmatprep.subr.mxu0 0.0
    %98 = vmatpush1.msra.mxu0 0.0
    %99 = vmatprep.subr.mxu0 0.0
    %100 = vmatpush1.msra.mxu0 0.0
    %101 = vmatprep.subr.mxu0 0.0
    %102 = vmatpush1.msra.mxu0 0.0
    %103 = vmatprep.subr.mxu0 0.0
    %104 = vmatpush1.msra.mxu0 0.0
    %105 = vmatprep.subr.mxu0 0.0
    %106 = vmatpush1.msra.mxu0 0.0
    %107 = vmatprep.subr.mxu0 0.0
    %108 = vmatpush1.msra.mxu0 0.0
    %109 = vmatprep.subr.mxu0 0.0
    %110 = vmatpush1.msra.mxu0 0.0
    %111 = vmatprep.mubr.f32.mxu0 0.0
    %v112 = vand.u32 %v14, 4294901760
    %v113 = vsub.f32 %v14, %v112
    %v114 = vand.u32 %v113, 4294901760
    %v115 = vsub.f32 %v113, %v114
    %v116 = vand.u32 %v115, 4294901760
    %117 = vmatmul.mubr.f32.gmra.mrb[0].mxu0 %v116
    %v118 = vpop.f32.mrb[0].mxu0
    %v119 = vadd.f32 0.0, %v118
    %v120 = vpop.f32.mrb[0].mxu0
    %121 = vdwg.mxu0
    %122 = vmatprep.subr.mxu0 0.0
    %v123 = vand.u32 %v15, 4294901760
    %v124 = vsub.f32 %v15, %v123
    %v125 = vand.u32 %v124, 4294901760
    %v126 = vsub.f32 %v124, %v125
    %v127 = vand.u32 %v126, 4294901760
    %128 = vmatpush1.msra.mxu0 %v127
    %129 = vmatprep.subr.mxu0 0.0
    %v130 = vand.u32 %v16, 4294901760
    %v131 = vsub.f32 %v16, %v130
    %v132 = vand.u32 %v131, 4294901760
    %v133 = vsub.f32 %v131, %v132
    %v134 = vand.u32 %v133, 4294901760
    %135 = vmatpush1.msra.mxu0 %v134
    %136 = vmatprep.subr.mxu0 0.0
    %v137 = vand.u32 %v17, 4294901760
    %v138 = vsub.f32 %v17, %v137
    %v139 = vand.u32 %v138, 4294901760
    %v140 = vsub.f32 %v138, %v139
    %v141 = vand.u32 %v140, 4294901760
    %142 = vmatpush1.msra.mxu0 %v141
    %143 = vmatprep.subr.mxu0 0.0
    %v144 = vand.u32 %v18, 4294901760
    %v145 = vsub.f32 %v18, %v144
    %v146 = vand.u32 %v145, 4294901760
    %v147 = vsub.f32 %v145, %v146
    %v148 = vand.u32 %v147, 4294901760
    %149 = vmatpush1.msra.mxu0 %v148
    %150 = vmatprep.subr.mxu0 0.0
    %v151 = vand.u32 %v19, 4294901760
    %v152 = vsub.f32 %v19, %v151
    %v153 = vand.u32 %v152, 4294901760
    %v154 = vsub.f32 %v152, %v153
    %v155 = vand.u32 %v154, 4294901760
    %156 = vmatpush1.msra.mxu0 %v155
    %157 = vmatprep.subr.mxu0 0.0
    %v158 = vand.u32 %v20, 4294901760
    %v159 = vsub.f32 %v20, %v158
    %v160 = vand.u32 %v159, 4294901760
    %v161 = vsub.f32 %v159, %v160
    %v162 = vand.u32 %v161, 4294901760
    %163 = vmatpush1.msra.mxu0 %v162
    %164 = vmatprep.subr.mxu0 0.0
    %v165 = vand.u32 %v21, 4294901760
    %v166 = vsub.f32 %v21, %v165
    %v167 = vand.u32 %v166, 4294901760
    %v168 = vsub.f32 %v166, %v167
    %v169 = vand.u32 %v168, 4294901760
    %170 = vmatpush1.msra.mxu0 %v169
    %171 = vmatprep.subr.mxu0 0.0
    %v172 = vand.u32 %v22, 4294901760
    %v173 = vsub.f32 %v22, %v172
    %v174 = vand.u32 %v173, 4294901760
    %v175 = vsub.f32 %v173, %v174
    %v176 = vand.u32 %v175, 4294901760
    %177 = vmatpush1.msra.mxu0 %v176
    %178 = vmatprep.subr.mxu0 0.0
    %v179 = vand.u32 %v23, 4294901760
    %v180 = vsub.f32 %v23, %v179
    %v181 = vand.u32 %v180, 4294901760
    %v182 = vsub.f32 %v180, %v181
    %v183 = vand.u32 %v182, 4294901760
    %184 = vmatpush1.msra.mxu0 %v183
    %185 = vmatprep.subr.mxu0 0.0
    %v186 = vand.u32 %v24, 4294901760
    %v187 = vsub.f32 %v24, %v186
    %v188 = vand.u32 %v187, 4294901760
    %v189 = vsub.f32 %v187, %v188
    %v190 = vand.u32 %v189, 4294901760
    %191 = vmatpush1.msra.mxu0 %v190
    %192 = vmatprep.subr.mxu0 0.0
    %v193 = vand.u32 %v25, 4294901760
    %v194 = vsub.f32 %v25, %v193
    %v195 = vand.u32 %v194, 4294901760
    %v196 = vsub.f32 %v194, %v195
    %v197 = vand.u32 %v196, 4294901760
    %198 = vmatpush1.msra.mxu0 %v197
    %199 = vmatprep.subr.mxu0 0.0
    %v200 = vand.u32 %v26, 4294901760
    %v201 = vsub.f32 %v26, %v200
    %v202 = vand.u32 %v201, 4294901760
    %v203 = vsub.f32 %v201, %v202
    %v204 = vand.u32 %v203, 4294901760
    %205 = vmatpush1.msra.mxu0 %v204
    %206 = vmatprep.subr.mxu0 0.0
    %v207 = vand.u32 %v27, 4294901760
    %v208 = vsub.f32 %v27, %v207
    %v209 = vand.u32 %v208, 4294901760
    %v210 = vsub.f32 %v208, %v209
    %v211 = vand.u32 %v210, 4294901760
    %212 = vmatpush1.msra.mxu0 %v211
    %213 = vmatprep.subr.mxu0 0.0
    %v214 = vand.u32 %v28, 4294901760
    %v215 = vsub.f32 %v28, %v214
    %v216 = vand.u32 %v215, 4294901760
    %v217 = vsub.f32 %v215, %v216
    %v218 = vand.u32 %v217, 4294901760
    %219 = vmatpush1.msra.mxu0 %v218
    %220 = vmatprep.subr.mxu0 0.0
    %v221 = vand.u32 %v29, 4294901760
    %v222 = vsub.f32 %v29, %v221
    %v223 = vand.u32 %v222, 4294901760
    %v224 = vsub.f32 %v222, %v223
    %v225 = vand.u32 %v224, 4294901760
    %226 = vmatpush1.msra.mxu0 %v225
    %227 = vmatprep.subr.mxu0 0.0
    %v228 = vand.u32 %v30, 4294901760
    %v229 = vsub.f32 %v30, %v228
    %v230 = vand.u32 %v229, 4294901760
    %v231 = vsub.f32 %v229, %v230
    %v232 = vand.u32 %v231, 4294901760
    %233 = vmatpush1.msra.mxu0 %v232
    %234 = vmatprep.subr.mxu0 0.0
    %235 = vmatpush1.msra.mxu0 0.0
    %236 = vmatprep.subr.mxu0 0.0
    %237 = vmatpush1.msra.mxu0 0.0
    %238 = vmatprep.subr.mxu0 0.0
    %239 = vmatpush1.msra.mxu0 0.0
    %240 = vmatprep.subr.mxu0 0.0
    %241 = vmatpush1.msra.mxu0 0.0
    %242 = vmatprep.subr.mxu0 0.0
    %243 = vmatpush1.msra.mxu0 0.0
    %244 = vmatprep.subr.mxu0 0.0
    %245 = vmatpush1.msra.mxu0 0.0
    %246 = vmatprep.subr.mxu0 0.0
    %247 = vmatpush1.msra.mxu0 0.0
    %248 = vmatprep.subr.mxu0 0.0
    %249 = vmatpush1.msra.mxu0 0.0
    %250 = vmatprep.subr.mxu0 0.0
    %251 = vmatpush1.msra.mxu0 0.0
    %252 = vmatprep.subr.mxu0 0.0
    %253 = vmatpush1.msra.mxu0 0.0
    %254 = vmatprep.subr.mxu0 0.0
    %255 = vmatpush1.msra.mxu0 0.0
    %256 = vmatprep.subr.mxu0 0.0
    %257 = vmatpush1.msra.mxu0 0.0
    %258 = vmatprep.subr.mxu0 0.0
    %259 = vmatpush1.msra.mxu0 0.0
    %260 = vmatprep.subr.mxu0 0.0
    %261 = vmatpush1.msra.mxu0 0.0
    %262 = vmatprep.subr.mxu0 0.0
    %263 = vmatpush1.msra.mxu0 0.0
    %264 = vmatprep.subr.mxu0 0.0
    %265 = vmatpush1.msra.mxu0 0.0
    %266 = vmatprep.mubr.f32.mxu0 0.0
    %v267 = vand.u32 %v14, 4294901760
    %268 = vmatmul.mubr.f32.gmra.mrb[0].mxu0 %v267
    %v269 = vpop.f32.mrb[0].mxu0
    %v270 = vadd.f32 %v119, %v269
    %v271 = vpop.f32.mrb[0].mxu0
    %272 = vdwg.mxu0
    %273 = vmatprep.subr.mxu0 0.0
    %v274 = vand.u32 %v15, 4294901760
    %v275 = vsub.f32 %v15, %v274
    %276 = vmatpush1.msra.mxu0 %v275
    %277 = vmatprep.subr.mxu0 0.0
    %v278 = vand.u32 %v16, 4294901760
    %v279 = vsub.f32 %v16, %v278
    %280 = vmatpush1.msra.mxu0 %v279
    %281 = vmatprep.subr.mxu0 0.0
    %v282 = vand.u32 %v17, 4294901760
    %v283 = vsub.f32 %v17, %v282
    %284 = vmatpush1.msra.mxu0 %v283
    %285 = vmatprep.subr.mxu0 0.0
    %v286 = vand.u32 %v18, 4294901760
    %v287 = vsub.f32 %v18, %v286
    %288 = vmatpush1.msra.mxu0 %v287
    %289 = vmatprep.subr.mxu0 0.0
    %v290 = vand.u32 %v19, 4294901760
    %v291 = vsub.f32 %v19, %v290
    %292 = vmatpush1.msra.mxu0 %v291
    %293 = vmatprep.subr.mxu0 0.0
    %v294 = vand.u32 %v20, 4294901760
    %v295 = vsub.f32 %v20, %v294
    %296 = vmatpush1.msra.mxu0 %v295
    %297 = vmatprep.subr.mxu0 0.0
    %v298 = vand.u32 %v21, 4294901760
    %v299 = vsub.f32 %v21, %v298
    %300 = vmatpush1.msra.mxu0 %v299
    %301 = vmatprep.subr.mxu0 0.0
    %v302 = vand.u32 %v22, 4294901760
    %v303 = vsub.f32 %v22, %v302
    %304 = vmatpush1.msra.mxu0 %v303
    %305 = vmatprep.subr.mxu0 0.0
    %v306 = vand.u32 %v23, 4294901760
    %v307 = vsub.f32 %v23, %v306
    %308 = vmatpush1.msra.mxu0 %v307
    %309 = vmatprep.subr.mxu0 0.0
    %v310 = vand.u32 %v24, 4294901760
    %v311 = vsub.f32 %v24, %v310
    %312 = vmatpush1.msra.mxu0 %v311
    %313 = vmatprep.subr.mxu0 0.0
    %v314 = vand.u32 %v25, 4294901760
    %v315 = vsub.f32 %v25, %v314
    %316 = vmatpush1.msra.mxu0 %v315
    %317 = vmatprep.subr.mxu0 0.0
    %v318 = vand.u32 %v26, 4294901760
    %v319 = vsub.f32 %v26, %v318
    %320 = vmatpush1.msra.mxu0 %v319
    %321 = vmatprep.subr.mxu0 0.0
    %v322 = vand.u32 %v27, 4294901760
    %v323 = vsub.f32 %v27, %v322
    %324 = vmatpush1.msra.mxu0 %v323
    %325 = vmatprep.subr.mxu0 0.0
    %v326 = vand.u32 %v28, 4294901760
    %v327 = vsub.f32 %v28, %v326
    %328 = vmatpush1.msra.mxu0 %v327
    %329 = vmatprep.subr.mxu0 0.0
    %v330 = vand.u32 %v29, 4294901760
    %v331 = vsub.f32 %v29, %v330
    %332 = vmatpush1.msra.mxu0 %v331
    %333 = vmatprep.subr.mxu0 0.0
    %v334 = vand.u32 %v30, 4294901760
    %v335 = vsub.f32 %v30, %v334
    %336 = vmatpush1.msra.mxu0 %v335
    %337 = vmatprep.subr.mxu0 0.0
    %338 = vmatpush1.msra.mxu0 0.0
    %339 = vmatprep.subr.mxu0 0.0
    %340 = vmatpush1.msra.mxu0 0.0
    %341 = vmatprep.subr.mxu0 0.0
    %342 = vmatpush1.msra.mxu0 0.0
    %343 = vmatprep.subr.mxu0 0.0
    %344 = vmatpush1.msra.mxu0 0.0
    %345 = vmatprep.subr.mxu0 0.0
    %346 = vmatpush1.msra.mxu0 0.0
    %347 = vmatprep.subr.mxu0 0.0
    %348 = vmatpush1.msra.mxu0 0.0
    %349 = vmatprep.subr.mxu0 0.0
    %350 = vmatpush1.msra.mxu0 0.0
    %351 = vmatprep.subr.mxu0 0.0
    %352 = vmatpush1.msra.mxu0 0.0
    %353 = vmatprep.subr.mxu0 0.0
    %354 = vmatpush1.msra.mxu0 0.0
    %355 = vmatprep.subr.mxu0 0.0
    %356 = vmatpush1.msra.mxu0 0.0
    %357 = vmatprep.subr.mxu0 0.0
    %358 = vmatpush1.msra.mxu0 0.0
    %359 = vmatprep.subr.mxu0 0.0
    %360 = vmatpush1.msra.mxu0 0.0
    %361 = vmatprep.subr.mxu0 0.0
    %362 = vmatpush1.msra.mxu0 0.0
    %363 = vmatprep.subr.mxu0 0.0
    %364 = vmatpush1.msra.mxu0 0.0
    %365 = vmatprep.subr.mxu0 0.0
    %366 = vmatpush1.msra.mxu0 0.0
    %367 = vmatprep.subr.mxu0 0.0
    %368 = vmatpush1.msra.mxu0 0.0
    %369 = vmatprep.mubr.f32.mxu0 0.0
    %v370 = vand.u32 %v14, 4294901760
    %v371 = vsub.f32 %v14, %v370
    %372 = vmatmul.mubr.f32.gmra.mrb[0].mxu0 %v371
    %v373 = vpop.f32.mrb[0].mxu0
    %v374 = vadd.f32 %v270, %v373
    %v375 = vpop.f32.mrb[0].mxu0
    %376 = vdwg.mxu0
    %377 = vmatprep.subr.mxu0 0.0
    %v378 = vand.u32 %v15, 4294901760
    %379 = vmatpush1.msra.mxu0 %v378
    %380 = vmatprep.subr.mxu0 0.0
    %v381 = vand.u32 %v16, 4294901760
    %382 = vmatpush1.msra.mxu0 %v381
    %383 = vmatprep.subr.mxu0 0.0
    %v384 = vand.u32 %v17, 4294901760
    %385 = vmatpush1.msra.mxu0 %v384
    %386 = vmatprep.subr.mxu0 0.0
    %v387 = vand.u32 %v18, 4294901760
    %388 = vmatpush1.msra.mxu0 %v387
    %389 = vmatprep.subr.mxu0 0.0
    %v390 = vand.u32 %v19, 4294901760
    %391 = vmatpush1.msra.mxu0 %v390
    %392 = vmatprep.subr.mxu0 0.0
    %v393 = vand.u32 %v20, 4294901760
    %394 = vmatpush1.msra.mxu0 %v393
    %395 = vmatprep.subr.mxu0 0.0
    %v396 = vand.u32 %v21, 4294901760
    %397 = vmatpush1.msra.mxu0 %v396
    %398 = vmatprep.subr.mxu0 0.0
    %v399 = vand.u32 %v22, 4294901760
    %400 = vmatpush1.msra.mxu0 %v399
    %401 = vmatprep.subr.mxu0 0.0
    %v402 = vand.u32 %v23, 4294901760
    %403 = vmatpush1.msra.mxu0 %v402
    %404 = vmatprep.subr.mxu0 0.0
    %v405 = vand.u32 %v24, 4294901760
    %406 = vmatpush1.msra.mxu0 %v405
    %407 = vmatprep.subr.mxu0 0.0
    %v408 = vand.u32 %v25, 4294901760
    %409 = vmatpush1.msra.mxu0 %v408
    %410 = vmatprep.subr.mxu0 0.0
    %v411 = vand.u32 %v26, 4294901760
    %412 = vmatpush1.msra.mxu0 %v411
    %413 = vmatprep.subr.mxu0 0.0
    %v414 = vand.u32 %v27, 4294901760
    %415 = vmatpush1.msra.mxu0 %v414
    %416 = vmatprep.subr.mxu0 0.0
    %v417 = vand.u32 %v28, 4294901760
    %418 = vmatpush1.msra.mxu0 %v417
    %419 = vmatprep.subr.mxu0 0.0
    %v420 = vand.u32 %v29, 4294901760
    %421 = vmatpush1.msra.mxu0 %v420
    %422 = vmatprep.subr.mxu0 0.0
    %v423 = vand.u32 %v30, 4294901760
    %424 = vmatpush1.msra.mxu0 %v423
    %425 = vmatprep.subr.mxu0 0.0
    %426 = vmatpush1.msra.mxu0 0.0
    %427 = vmatprep.subr.mxu0 0.0
    %428 = vmatpush1.msra.mxu0 0.0
    %429 = vmatprep.subr.mxu0 0.0
    %430 = vmatpush1.msra.mxu0 0.0
    %431 = vmatprep.subr.mxu0 0.0
    %432 = vmatpush1.msra.mxu0 0.0
    %433 = vmatprep.subr.mxu0 0.0
    %434 = vmatpush1.msra.mxu0 0.0
    %435 = vmatprep.subr.mxu0 0.0
    %436 = vmatpush1.msra.mxu0 0.0
    %437 = vmatprep.subr.mxu0 0.0
    %438 = vmatpush1.msra.mxu0 0.0
    %439 = vmatprep.subr.mxu0 0.0
    %440 = vmatpush1.msra.mxu0 0.0
    %441 = vmatprep.subr.mxu0 0.0
    %442 = vmatpush1.msra.mxu0 0.0
    %443 = vmatprep.subr.mxu0 0.0
    %444 = vmatpush1.msra.mxu0 0.0
    %445 = vmatprep.subr.mxu0 0.0
    %446 = vmatpush1.msra.mxu0 0.0
    %447 = vmatprep.subr.mxu0 0.0
    %448 = vmatpush1.msra.mxu0 0.0
    %449 = vmatprep.subr.mxu0 0.0
    %450 = vmatpush1.msra.mxu0 0.0
    %451 = vmatprep.subr.mxu0 0.0
    %452 = vmatpush1.msra.mxu0 0.0
    %453 = vmatprep.subr.mxu0 0.0
    %454 = vmatpush1.msra.mxu0 0.0
    %455 = vmatprep.subr.mxu0 0.0
    %456 = vmatpush1.msra.mxu0 0.0
    %457 = vmatprep.mubr.f32.mxu0 0.0
    %v458 = vand.u32 %v14, 4294901760
    %v459 = vsub.f32 %v14, %v458
    %v460 = vand.u32 %v459, 4294901760
    %461 = vmatmul.mubr.f32.gmra.mrb[0].mxu0 %v460
    %v462 = vpop.f32.mrb[0].mxu0
    %v463 = vadd.f32 %v374, %v462
    %v464 = vpop.f32.mrb[0].mxu0
    %465 = vdwg.mxu0
    %466 = vmatprep.subr.mxu0 0.0
    %v467 = vand.u32 %v15, 4294901760
    %v468 = vsub.f32 %v15, %v467
    %v469 = vand.u32 %v468, 4294901760
    %470 = vmatpush1.msra.mxu0 %v469
    %471 = vmatprep.subr.mxu0 0.0
    %v472 = vand.u32 %v16, 4294901760
    %v473 = vsub.f32 %v16, %v472
    %v474 = vand.u32 %v473, 4294901760
    %475 = vmatpush1.msra.mxu0 %v474
    %476 = vmatprep.subr.mxu0 0.0
    %v477 = vand.u32 %v17, 4294901760
    %v478 = vsub.f32 %v17, %v477
    %v479 = vand.u32 %v478, 4294901760
    %480 = vmatpush1.msra.mxu0 %v479
    %481 = vmatprep.subr.mxu0 0.0
    %v482 = vand.u32 %v18, 4294901760
    %v483 = vsub.f32 %v18, %v482
    %v484 = vand.u32 %v483, 4294901760
    %485 = vmatpush1.msra.mxu0 %v484
    %486 = vmatprep.subr.mxu0 0.0
    %v487 = vand.u32 %v19, 4294901760
    %v488 = vsub.f32 %v19, %v487
    %v489 = vand.u32 %v488, 4294901760
    %490 = vmatpush1.msra.mxu0 %v489
    %491 = vmatprep.subr.mxu0 0.0
    %v492 = vand.u32 %v20, 4294901760
    %v493 = vsub.f32 %v20, %v492
    %v494 = vand.u32 %v493, 4294901760
    %495 = vmatpush1.msra.mxu0 %v494
    %496 = vmatprep.subr.mxu0 0.0
    %v497 = vand.u32 %v21, 4294901760
    %v498 = vsub.f32 %v21, %v497
    %v499 = vand.u32 %v498, 4294901760
    %500 = vmatpush1.msra.mxu0 %v499
    %501 = vmatprep.subr.mxu0 0.0
    %v502 = vand.u32 %v22, 4294901760
    %v503 = vsub.f32 %v22, %v502
    %v504 = vand.u32 %v503, 4294901760
    %505 = vmatpush1.msra.mxu0 %v504
    %506 = vmatprep.subr.mxu0 0.0
    %v507 = vand.u32 %v23, 4294901760
    %v508 = vsub.f32 %v23, %v507
    %v509 = vand.u32 %v508, 4294901760
    %510 = vmatpush1.msra.mxu0 %v509
    %511 = vmatprep.subr.mxu0 0.0
    %v512 = vand.u32 %v24, 4294901760
    %v513 = vsub.f32 %v24, %v512
    %v514 = vand.u32 %v513, 4294901760
    %515 = vmatpush1.msra.mxu0 %v514
    %516 = vmatprep.subr.mxu0 0.0
    %v517 = vand.u32 %v25, 4294901760
    %v518 = vsub.f32 %v25, %v517
    %v519 = vand.u32 %v518, 4294901760
    %520 = vmatpush1.msra.mxu0 %v519
    %521 = vmatprep.subr.mxu0 0.0
    %v522 = vand.u32 %v26, 4294901760
    %v523 = vsub.f32 %v26, %v522
    %v524 = vand.u32 %v523, 4294901760
    %525 = vmatpush1.msra.mxu0 %v524
    %526 = vmatprep.subr.mxu0 0.0
    %v527 = vand.u32 %v27, 4294901760
    %v528 = vsub.f32 %v27, %v527
    %v529 = vand.u32 %v528, 4294901760
    %530 = vmatpush1.msra.mxu0 %v529
    %531 = vmatprep.subr.mxu0 0.0
    %v532 = vand.u32 %v28, 4294901760
    %v533 = vsub.f32 %v28, %v532
    %v534 = vand.u32 %v533, 4294901760
    %535 = vmatpush1.msra.mxu0 %v534
    %536 = vmatprep.subr.mxu0 0.0
    %v537 = vand.u32 %v29, 4294901760
    %v538 = vsub.f32 %v29, %v537
    %v539 = vand.u32 %v538, 4294901760
    %540 = vmatpush1.msra.mxu0 %v539
    %541 = vmatprep.subr.mxu0 0.0
    %v542 = vand.u32 %v30, 4294901760
    %v543 = vsub.f32 %v30, %v542
    %v544 = vand.u32 %v543, 4294901760
    %545 = vmatpush1.msra.mxu0 %v544
    %546 = vmatprep.subr.mxu0 0.0
    %547 = vmatpush1.msra.mxu0 0.0
    %548 = vmatprep.subr.mxu0 0.0
    %549 = vmatpush1.msra.mxu0 0.0
    %550 = vmatprep.subr.mxu0 0.0
    %551 = vmatpush1.msra.mxu0 0.0
    %552 = vmatprep.subr.mxu0 0.0
    %553 = vmatpush1.msra.mxu0 0.0
    %554 = vmatprep.subr.mxu0 0.0
    %555 = vmatpush1.msra.mxu0 0.0
    %556 = vmatprep.subr.mxu0 0.0
    %557 = vmatpush1.msra.mxu0 0.0
    %558 = vmatprep.subr.mxu0 0.0
    %559 = vmatpush1.msra.mxu0 0.0
    %560 = vmatprep.subr.mxu0 0.0
    %561 = vmatpush1.msra.mxu0 0.0
    %562 = vmatprep.subr.mxu0 0.0
    %563 = vmatpush1.msra.mxu0 0.0
    %564 = vmatprep.subr.mxu0 0.0
    %565 = vmatpush1.msra.mxu0 0.0
    %566 = vmatprep.subr.mxu0 0.0
    %567 = vmatpush1.msra.mxu0 0.0
    %568 = vmatprep.subr.mxu0 0.0
    %569 = vmatpush1.msra.mxu0 0.0
    %570 = vmatprep.subr.mxu0 0.0
    %571 = vmatpush1.msra.mxu0 0.0
    %572 = vmatprep.subr.mxu0 0.0
    %573 = vmatpush1.msra.mxu0 0.0
    %574 = vmatprep.subr.mxu0 0.0
    %575 = vmatpush1.msra.mxu0 0.0
    %576 = vmatprep.subr.mxu0 0.0
    %577 = vmatpush1.msra.mxu0 0.0
    %578 = vmatprep.mubr.f32.mxu0 0.0
    %v579 = vand.u32 %v14, 4294901760
    %580 = vmatmul.mubr.f32.gmra.mrb[0].mxu0 %v579
    %v581 = vpop.f32.mrb[0].mxu0
    %v582 = vadd.f32 %v463, %v581
    %v583 = vpop.f32.mrb[0].mxu0
    %584 = vdwg.mxu0
    %585 = vmatprep.subr.mxu0 0.0
    %v586 = vand.u32 %v15, 4294901760
    %587 = vmatpush1.msra.mxu0 %v586
    %588 = vmatprep.subr.mxu0 0.0
    %v589 = vand.u32 %v16, 4294901760
    %590 = vmatpush1.msra.mxu0 %v589
    %591 = vmatprep.subr.mxu0 0.0
    %v592 = vand.u32 %v17, 4294901760
    %593 = vmatpush1.msra.mxu0 %v592
    %594 = vmatprep.subr.mxu0 0.0
    %v595 = vand.u32 %v18, 4294901760
    %596 = vmatpush1.msra.mxu0 %v595
    %597 = vmatprep.subr.mxu0 0.0
    %v598 = vand.u32 %v19, 4294901760
    %599 = vmatpush1.msra.mxu0 %v598
    %600 = vmatprep.subr.mxu0 0.0
    %v601 = vand.u32 %v20, 4294901760
    %602 = vmatpush1.msra.mxu0 %v601
    %603 = vmatprep.subr.mxu0 0.0
    %v604 = vand.u32 %v21, 4294901760
    %605 = vmatpush1.msra.mxu0 %v604
    %606 = vmatprep.subr.mxu0 0.0
    %v607 = vand.u32 %v22, 4294901760
    %608 = vmatpush1.msra.mxu0 %v607
    %609 = vmatprep.subr.mxu0 0.0
    %v610 = vand.u32 %v23, 4294901760
    %611 = vmatpush1.msra.mxu0 %v610
    %612 = vmatprep.subr.mxu0 0.0
    %v613 = vand.u32 %v24, 4294901760
    %614 = vmatpush1.msra.mxu0 %v613
    %615 = vmatprep.subr.mxu0 0.0
    %v616 = vand.u32 %v25, 4294901760
    %617 = vmatpush1.msra.mxu0 %v616
    %618 = vmatprep.subr.mxu0 0.0
    %v619 = vand.u32 %v26, 4294901760
    %620 = vmatpush1.msra.mxu0 %v619
    %621 = vmatprep.subr.mxu0 0.0
    %v622 = vand.u32 %v27, 4294901760
    %623 = vmatpush1.msra.mxu0 %v622
    %624 = vmatprep.subr.mxu0 0.0
    %v625 = vand.u32 %v28, 4294901760
    %626 = vmatpush1.msra.mxu0 %v625
    %627 = vmatprep.subr.mxu0 0.0
    %v628 = vand.u32 %v29, 4294901760
    %629 = vmatpush1.msra.mxu0 %v628
    %630 = vmatprep.subr.mxu0 0.0
    %v631 = vand.u32 %v30, 4294901760
    %632 = vmatpush1.msra.mxu0 %v631
    %633 = vmatprep.subr.mxu0 0.0
    %634 = vmatpush1.msra.mxu0 0.0
    %635 = vmatprep.subr.mxu0 0.0
    %636 = vmatpush1.msra.mxu0 0.0
    %637 = vmatprep.subr.mxu0 0.0
    %638 = vmatpush1.msra.mxu0 0.0
    %639 = vmatprep.subr.mxu0 0.0
    %640 = vmatpush1.msra.mxu0 0.0
    %641 = vmatprep.subr.mxu0 0.0
    %642 = vmatpush1.msra.mxu0 0.0
    %643 = vmatprep.subr.mxu0 0.0
    %644 = vmatpush1.msra.mxu0 0.0
    %645 = vmatprep.subr.mxu0 0.0
    %646 = vmatpush1.msra.mxu0 0.0
    %647 = vmatprep.subr.mxu0 0.0
    %648 = vmatpush1.msra.mxu0 0.0
    %649 = vmatprep.subr.mxu0 0.0
    %650 = vmatpush1.msra.mxu0 0.0
    %651 = vmatprep.subr.mxu0 0.0
    %652 = vmatpush1.msra.mxu0 0.0
    %653 = vmatprep.subr.mxu0 0.0
    %654 = vmatpush1.msra.mxu0 0.0
    %655 = vmatprep.subr.mxu0 0.0
    %656 = vmatpush1.msra.mxu0 0.0
    %657 = vmatprep.subr.mxu0 0.0
    %658 = vmatpush1.msra.mxu0 0.0
    %659 = vmatprep.subr.mxu0 0.0
    %660 = vmatpush1.msra.mxu0 0.0
    %661 = vmatprep.subr.mxu0 0.0
    %662 = vmatpush1.msra.mxu0 0.0
    %663 = vmatprep.subr.mxu0 0.0
    %664 = vmatpush1.msra.mxu0 0.0
    %665 = vmatprep.mubr.f32.mxu0 0.0
    %v666 = vand.u32 %v14, 4294901760
    %667 = vmatmul.mubr.f32.gmra.mrb[0].mxu0 %v666
    %v668 = vpop.f32.mrb[0].mxu0
    %v669 = vadd.f32 %v582, %v668
    %v670 = vpop.f32.mrb[0].mxu0
    %671 = vdwg.mxu0
    %v672 = vmul.f32 %v14, %v14
    %673 = vmatprep.subr.mxu0 0.0
    %v674 = vand.u32 %v15, 4294901760
    %675 = vmatpush1.msra.mxu0 %v674
    %676 = vmatprep.subr.mxu0 0.0
    %v677 = vand.u32 %v16, 4294901760
    %678 = vmatpush1.msra.mxu0 %v677
    %679 = vmatprep.subr.mxu0 0.0
    %v680 = vand.u32 %v17, 4294901760
    %681 = vmatpush1.msra.mxu0 %v680
    %682 = vmatprep.subr.mxu0 0.0
    %v683 = vand.u32 %v18, 4294901760
    %684 = vmatpush1.msra.mxu0 %v683
    %685 = vmatprep.subr.mxu0 0.0
    %v686 = vand.u32 %v19, 4294901760
    %687 = vmatpush1.msra.mxu0 %v686
    %688 = vmatprep.subr.mxu0 0.0
    %v689 = vand.u32 %v20, 4294901760
    %690 = vmatpush1.msra.mxu0 %v689
    %691 = vmatprep.subr.mxu0 0.0
    %v692 = vand.u32 %v21, 4294901760
    %693 = vmatpush1.msra.mxu0 %v692
    %694 = vmatprep.subr.mxu0 0.0
    %v695 = vand.u32 %v22, 4294901760
    %696 = vmatpush1.msra.mxu0 %v695
    %697 = vmatprep.subr.mxu0 0.0
    %v698 = vand.u32 %v23, 4294901760
    %699 = vmatpush1.msra.mxu0 %v698
    %700 = vmatprep.subr.mxu0 0.0
    %v701 = vand.u32 %v24, 4294901760
    %702 = vmatpush1.msra.mxu0 %v701
    %703 = vmatprep.subr.mxu0 0.0
    %v704 = vand.u32 %v25, 4294901760
    %705 = vmatpush1.msra.mxu0 %v704
    %706 = vmatprep.subr.mxu0 0.0
    %v707 = vand.u32 %v26, 4294901760
    %708 = vmatpush1.msra.mxu0 %v707
    %709 = vmatprep.subr.mxu0 0.0
    %v710 = vand.u32 %v27, 4294901760
    %711 = vmatpush1.msra.mxu0 %v710
    %712 = vmatprep.subr.mxu0 0.0
    %v713 = vand.u32 %v28, 4294901760
    %714 = vmatpush1.msra.mxu0 %v713
    %715 = vmatprep.subr.mxu0 0.0
    %v716 = vand.u32 %v29, 4294901760
    %717 = vmatpush1.msra.mxu0 %v716
    %718 = vmatprep.subr.mxu0 0.0
    %v719 = vand.u32 %v30, 4294901760
    %720 = vmatpush1.msra.mxu0 %v719
    %721 = vmatprep.subr.mxu0 0.0
    %722 = vmatpush1.msra.mxu0 0.0
    %723 = vmatprep.subr.mxu0 0.0
    %724 = vmatpush1.msra.mxu0 0.0
    %725 = vmatprep.subr.mxu0 0.0
    %726 = vmatpush1.msra.mxu0 0.0
    %727 = vmatprep.subr.mxu0 0.0
    %728 = vmatpush1.msra.mxu0 0.0
    %729 = vmatprep.subr.mxu0 0.0
    %730 = vmatpush1.msra.mxu0 0.0
    %731 = vmatprep.subr.mxu0 0.0
    %732 = vmatpush1.msra.mxu0 0.0
    %733 = vmatprep.subr.mxu0 0.0
    %734 = vmatpush1.msra.mxu0 0.0
    %735 = vmatprep.subr.mxu0 0.0
    %736 = vmatpush1.msra.mxu0 0.0
    %737 = vmatprep.subr.mxu0 0.0
    %738 = vmatpush1.msra.mxu0 0.0
    %739 = vmatprep.subr.mxu0 0.0
    %740 = vmatpush1.msra.mxu0 0.0
    %741 = vmatprep.subr.mxu0 0.0
    %742 = vmatpush1.msra.mxu0 0.0
    %743 = vmatprep.subr.mxu0 0.0
    %744 = vmatpush1.msra.mxu0 0.0
    %745 = vmatprep.subr.mxu0 0.0
    %746 = vmatpush1.msra.mxu0 0.0
    %747 = vmatprep.subr.mxu0 0.0
    %748 = vmatpush1.msra.mxu0 0.0
    %749 = vmatprep.subr.mxu0 0.0
    %750 = vmatpush1.msra.mxu0 0.0
    %751 = vmatprep.subr.mxu0 0.0
    %752 = vmatpush1.msra.mxu0 0.0
    %753 = vmatprep.mubr.f32.mxu0 0.0
    %v754 = vand.u32 %v672, 4294901760
    %v755 = vsub.f32 %v672, %v754
    %v756 = vand.u32 %v755, 4294901760
    %v757 = vsub.f32 %v755, %v756
    %v758 = vand.u32 %v757, 4294901760
    %759 = vmatmul.mubr.f32.gmra.mrb[0].mxu0 %v758
    %v760 = vpop.f32.mrb[0].mxu0
    %v761 = vadd.f32 0.0, %v760
    %v762 = vpop.f32.mrb[0].mxu0
    %763 = vdwg.mxu0
    %764 = vmatprep.subr.mxu0 0.0
    %v765 = vand.u32 %v15, 4294901760
    %v766 = vsub.f32 %v15, %v765
    %v767 = vand.u32 %v766, 4294901760
    %v768 = vsub.f32 %v766, %v767
    %v769 = vand.u32 %v768, 4294901760
    %770 = vmatpush1.msra.mxu0 %v769
    %771 = vmatprep.subr.mxu0 0.0
    %v772 = vand.u32 %v16, 4294901760
    %v773 = vsub.f32 %v16, %v772
    %v774 = vand.u32 %v773, 4294901760
    %v775 = vsub.f32 %v773, %v774
    %v776 = vand.u32 %v775, 4294901760
    %777 = vmatpush1.msra.mxu0 %v776
    %778 = vmatprep.subr.mxu0 0.0
    %v779 = vand.u32 %v17, 4294901760
    %v780 = vsub.f32 %v17, %v779
    %v781 = vand.u32 %v780, 4294901760
    %v782 = vsub.f32 %v780, %v781
    %v783 = vand.u32 %v782, 4294901760
    %784 = vmatpush1.msra.mxu0 %v783
    %785 = vmatprep.subr.mxu0 0.0
    %v786 = vand.u32 %v18, 4294901760
    %v787 = vsub.f32 %v18, %v786
    %v788 = vand.u32 %v787, 4294901760
    %v789 = vsub.f32 %v787, %v788
    %v790 = vand.u32 %v789, 4294901760
    %791 = vmatpush1.msra.mxu0 %v790
    %792 = vmatprep.subr.mxu0 0.0
    %v793 = vand.u32 %v19, 4294901760
    %v794 = vsub.f32 %v19, %v793
    %v795 = vand.u32 %v794, 4294901760
    %v796 = vsub.f32 %v794, %v795
    %v797 = vand.u32 %v796, 4294901760
    %798 = vmatpush1.msra.mxu0 %v797
    %799 = vmatprep.subr.mxu0 0.0
    %v800 = vand.u32 %v20, 4294901760
    %v801 = vsub.f32 %v20, %v800
    %v802 = vand.u32 %v801, 4294901760
    %v803 = vsub.f32 %v801, %v802
    %v804 = vand.u32 %v803, 4294901760
    %805 = vmatpush1.msra.mxu0 %v804
    %806 = vmatprep.subr.mxu0 0.0
    %v807 = vand.u32 %v21, 4294901760
    %v808 = vsub.f32 %v21, %v807
    %v809 = vand.u32 %v808, 4294901760
    %v810 = vsub.f32 %v808, %v809
    %v811 = vand.u32 %v810, 4294901760
    %812 = vmatpush1.msra.mxu0 %v811
    %813 = vmatprep.subr.mxu0 0.0
    %v814 = vand.u32 %v22, 4294901760
    %v815 = vsub.f32 %v22, %v814
    %v816 = vand.u32 %v815, 4294901760
    %v817 = vsub.f32 %v815, %v816
    %v818 = vand.u32 %v817, 4294901760
    %819 = vmatpush1.msra.mxu0 %v818
    %820 = vmatprep.subr.mxu0 0.0
    %v821 = vand.u32 %v23, 4294901760
    %v822 = vsub.f32 %v23, %v821
    %v823 = vand.u32 %v822, 4294901760
    %v824 = vsub.f32 %v822, %v823
    %v825 = vand.u32 %v824, 4294901760
    %826 = vmatpush1.msra.mxu0 %v825
    %827 = vmatprep.subr.mxu0 0.0
    %v828 = vand.u32 %v24, 4294901760
    %v829 = vsub.f32 %v24, %v828
    %v830 = vand.u32 %v829, 4294901760
    %v831 = vsub.f32 %v829, %v830
    %v832 = vand.u32 %v831, 4294901760
    %833 = vmatpush1.msra.mxu0 %v832
    %834 = vmatprep.subr.mxu0 0.0
    %v835 = vand.u32 %v25, 4294901760
    %v836 = vsub.f32 %v25, %v835
    %v837 = vand.u32 %v836, 4294901760
    %v838 = vsub.f32 %v836, %v837
    %v839 = vand.u32 %v838, 4294901760
    %840 = vmatpush1.msra.mxu0 %v839
    %841 = vmatprep.subr.mxu0 0.0
    %v842 = vand.u32 %v26, 4294901760
    %v843 = vsub.f32 %v26, %v842
    %v844 = vand.u32 %v843, 4294901760
    %v845 = vsub.f32 %v843, %v844
    %v846 = vand.u32 %v845, 4294901760
    %847 = vmatpush1.msra.mxu0 %v846
    %848 = vmatprep.subr.mxu0 0.0
    %v849 = vand.u32 %v27, 4294901760
    %v850 = vsub.f32 %v27, %v849
    %v851 = vand.u32 %v850, 4294901760
    %v852 = vsub.f32 %v850, %v851
    %v853 = vand.u32 %v852, 4294901760
    %854 = vmatpush1.msra.mxu0 %v853
    %855 = vmatprep.subr.mxu0 0.0
    %v856 = vand.u32 %v28, 4294901760
    %v857 = vsub.f32 %v28, %v856
    %v858 = vand.u32 %v857, 4294901760
    %v859 = vsub.f32 %v857, %v858
    %v860 = vand.u32 %v859, 4294901760
    %861 = vmatpush1.msra.mxu0 %v860
    %862 = vmatprep.subr.mxu0 0.0
    %v863 = vand.u32 %v29, 4294901760
    %v864 = vsub.f32 %v29, %v863
    %v865 = vand.u32 %v864, 4294901760
    %v866 = vsub.f32 %v864, %v865
    %v867 = vand.u32 %v866, 4294901760
    %868 = vmatpush1.msra.mxu0 %v867
    %869 = vmatprep.subr.mxu0 0.0
    %v870 = vand.u32 %v30, 4294901760
    %v871 = vsub.f32 %v30, %v870
    %v872 = vand.u32 %v871, 4294901760
    %v873 = vsub.f32 %v871, %v872
    %v874 = vand.u32 %v873, 4294901760
    %875 = vmatpush1.msra.mxu0 %v874
    %876 = vmatprep.subr.mxu0 0.0
    %877 = vmatpush1.msra.mxu0 0.0
    %878 = vmatprep.subr.mxu0 0.0
    %879 = vmatpush1.msra.mxu0 0.0
    %880 = vmatprep.subr.mxu0 0.0
    %881 = vmatpush1.msra.mxu0 0.0
    %882 = vmatprep.subr.mxu0 0.0
    %883 = vmatpush1.msra.mxu0 0.0
    %884 = vmatprep.subr.mxu0 0.0
    %885 = vmatpush1.msra.mxu0 0.0
    %886 = vmatprep.subr.mxu0 0.0
    %887 = vmatpush1.msra.mxu0 0.0
    %888 = vmatprep.subr.mxu0 0.0
    %889 = vmatpush1.msra.mxu0 0.0
    %890 = vmatprep.subr.mxu0 0.0
    %891 = vmatpush1.msra.mxu0 0.0
    %892 = vmatprep.subr.mxu0 0.0
    %893 = vmatpush1.msra.mxu0 0.0
    %894 = vmatprep.subr.mxu0 0.0
    %895 = vmatpush1.msra.mxu0 0.0
    %896 = vmatprep.subr.mxu0 0.0
    %897 = vmatpush1.msra.mxu0 0.0
    %898 = vmatprep.subr.mxu0 0.0
    %899 = vmatpush1.msra.mxu0 0.0
    %900 = vmatprep.subr.mxu0 0.0
    %901 = vmatpush1.msra.mxu0 0.0
    %902 = vmatprep.subr.mxu0 0.0
    %903 = vmatpush1.msra.mxu0 0.0
    %904 = vmatprep.subr.mxu0 0.0
    %905 = vmatpush1.msra.mxu0 0.0
    %906 = vmatprep.subr.mxu0 0.0
    %907 = vmatpush1.msra.mxu0 0.0
    %908 = vmatprep.mubr.f32.mxu0 0.0
    %v909 = vand.u32 %v672, 4294901760
    %910 = vmatmul.mubr.f32.gmra.mrb[0].mxu0 %v909
    %v911 = vpop.f32.mrb[0].mxu0
    %v912 = vadd.f32 %v761, %v911
    %v913 = vpop.f32.mrb[0].mxu0
    %914 = vdwg.mxu0
    %915 = vmatprep.subr.mxu0 0.0
    %v916 = vand.u32 %v15, 4294901760
    %v917 = vsub.f32 %v15, %v916
    %918 = vmatpush1.msra.mxu0 %v917
    %919 = vmatprep.subr.mxu0 0.0
    %v920 = vand.u32 %v16, 4294901760
    %v921 = vsub.f32 %v16, %v920
    %922 = vmatpush1.msra.mxu0 %v921
    %923 = vmatprep.subr.mxu0 0.0
    %v924 = vand.u32 %v17, 4294901760
    %v925 = vsub.f32 %v17, %v924
    %926 = vmatpush1.msra.mxu0 %v925
    %927 = vmatprep.subr.mxu0 0.0
    %v928 = vand.u32 %v18, 4294901760
    %v929 = vsub.f32 %v18, %v928
    %930 = vmatpush1.msra.mxu0 %v929
    %931 = vmatprep.subr.mxu0 0.0
    %v932 = vand.u32 %v19, 4294901760
    %v933 = vsub.f32 %v19, %v932
    %934 = vmatpush1.msra.mxu0 %v933
    %935 = vmatprep.subr.mxu0 0.0
    %v936 = vand.u32 %v20, 4294901760
    %v937 = vsub.f32 %v20, %v936
    %938 = vmatpush1.msra.mxu0 %v937
    %939 = vmatprep.subr.mxu0 0.0
    %v940 = vand.u32 %v21, 4294901760
    %v941 = vsub.f32 %v21, %v940
    %942 = vmatpush1.msra.mxu0 %v941
    %943 = vmatprep.subr.mxu0 0.0
    %v944 = vand.u32 %v22, 4294901760
    %v945 = vsub.f32 %v22, %v944
    %946 = vmatpush1.msra.mxu0 %v945
    %947 = vmatprep.subr.mxu0 0.0
    %v948 = vand.u32 %v23, 4294901760
    %v949 = vsub.f32 %v23, %v948
    %950 = vmatpush1.msra.mxu0 %v949
    %951 = vmatprep.subr.mxu0 0.0
    %v952 = vand.u32 %v24, 4294901760
    %v953 = vsub.f32 %v24, %v952
    %954 = vmatpush1.msra.mxu0 %v953
    %955 = vmatprep.subr.mxu0 0.0
    %v956 = vand.u32 %v25, 4294901760
    %v957 = vsub.f32 %v25, %v956
    %958 = vmatpush1.msra.mxu0 %v957
    %959 = vmatprep.subr.mxu0 0.0
    %v960 = vand.u32 %v26, 4294901760
    %v961 = vsub.f32 %v26, %v960
    %962 = vmatpush1.msra.mxu0 %v961
    %963 = vmatprep.subr.mxu0 0.0
    %v964 = vand.u32 %v27, 4294901760
    %v965 = vsub.f32 %v27, %v964
    %966 = vmatpush1.msra.mxu0 %v965
    %967 = vmatprep.subr.mxu0 0.0
    %v968 = vand.u32 %v28, 4294901760
    %v969 = vsub.f32 %v28, %v968
    %970 = vmatpush1.msra.mxu0 %v969
    %971 = vmatprep.subr.mxu0 0.0
    %v972 = vand.u32 %v29, 4294901760
    %v973 = vsub.f32 %v29, %v972
    %974 = vmatpush1.msra.mxu0 %v973
    %975 = vmatprep.subr.mxu0 0.0
    %v976 = vand.u32 %v30, 4294901760
    %v977 = vsub.f32 %v30, %v976
    %978 = vmatpush1.msra.mxu0 %v977
    %979 = vmatprep.subr.mxu0 0.0
    %980 = vmatpush1.msra.mxu0 0.0
    %981 = vmatprep.subr.mxu0 0.0
    %982 = vmatpush1.msra.mxu0 0.0
    %983 = vmatprep.subr.mxu0 0.0
    %984 = vmatpush1.msra.mxu0 0.0
    %985 = vmatprep.subr.mxu0 0.0
    %986 = vmatpush1.msra.mxu0 0.0
    %987 = vmatprep.subr.mxu0 0.0
    %988 = vmatpush1.msra.mxu0 0.0
    %989 = vmatprep.subr.mxu0 0.0
    %990 = vmatpush1.msra.mxu0 0.0
    %991 = vmatprep.subr.mxu0 0.0
    %992 = vmatpush1.msra.mxu0 0.0
    %993 = vmatprep.subr.mxu0 0.0
    %994 = vmatpush1.msra.mxu0 0.0
    %995 = vmatprep.subr.mxu0 0.0
    %996 = vmatpush1.msra.mxu0 0.0
    %997 = vmatprep.subr.mxu0 0.0
    %998 = vmatpush1.msra.mxu0 0.0
    %999 = vmatprep.subr.mxu0 0.0
    %1000 = vmatpush1.msra.mxu0 0.0
    %1001 = vmatprep.subr.mxu0 0.0
    %1002 = vmatpush1.msra.mxu0 0.0
    %1003 = vmatprep.subr.mxu0 0.0
    %1004 = vmatpush1.msra.mxu0 0.0
    %1005 = vmatprep.subr.mxu0 0.0
    %1006 = vmatpush1.msra.mxu0 0.0
    %1007 = vmatprep.subr.mxu0 0.0
    %1008 = vmatpush1.msra.mxu0 0.0
    %1009 = vmatprep.subr.mxu0 0.0
    %1010 = vmatpush1.msra.mxu0 0.0
    %1011 = vmatprep.mubr.f32.mxu0 0.0
    %v1012 = vand.u32 %v672, 4294901760
    %v1013 = vsub.f32 %v672, %v1012
    %1014 = vmatmul.mubr.f32.gmra.mrb[0].mxu0 %v1013
    %v1015 = vpop.f32.mrb[0].mxu0
    %v1016 = vadd.f32 %v912, %v1015
    %v1017 = vpop.f32.mrb[0].mxu0
    %1018 = vdwg.mxu0
    %1019 = vmatprep.subr.mxu0 0.0
    %v1020 = vand.u32 %v15, 4294901760
    %1021 = vmatpush1.msra.mxu0 %v1020
    %1022 = vmatprep.subr.mxu0 0.0
    %v1023 = vand.u32 %v16, 4294901760
    %1024 = vmatpush1.msra.mxu0 %v1023
    %1025 = vmatprep.subr.mxu0 0.0
    %v1026 = vand.u32 %v17, 4294901760
    %1027 = vmatpush1.msra.mxu0 %v1026
    %1028 = vmatprep.subr.mxu0 0.0
    %v1029 = vand.u32 %v18, 4294901760
    %1030 = vmatpush1.msra.mxu0 %v1029
    %1031 = vmatprep.subr.mxu0 0.0
    %v1032 = vand.u32 %v19, 4294901760
    %1033 = vmatpush1.msra.mxu0 %v1032
    %1034 = vmatprep.subr.mxu0 0.0
    %v1035 = vand.u32 %v20, 4294901760
    %1036 = vmatpush1.msra.mxu0 %v1035
    %1037 = vmatprep.subr.mxu0 0.0
    %v1038 = vand.u32 %v21, 4294901760
    %1039 = vmatpush1.msra.mxu0 %v1038
    %1040 = vmatprep.subr.mxu0 0.0
    %v1041 = vand.u32 %v22, 4294901760
    %1042 = vmatpush1.msra.mxu0 %v1041
    %1043 = vmatprep.subr.mxu0 0.0
    %v1044 = vand.u32 %v23, 4294901760
    %1045 = vmatpush1.msra.mxu0 %v1044
    %1046 = vmatprep.subr.mxu0 0.0
    %v1047 = vand.u32 %v24, 4294901760
    %1048 = vmatpush1.msra.mxu0 %v1047
    %1049 = vmatprep.subr.mxu0 0.0
    %v1050 = vand.u32 %v25, 4294901760
    %1051 = vmatpush1.msra.mxu0 %v1050
    %1052 = vmatprep.subr.mxu0 0.0
    %v1053 = vand.u32 %v26, 4294901760
    %1054 = vmatpush1.msra.mxu0 %v1053
    %1055 = vmatprep.subr.mxu0 0.0
    %v1056 = vand.u32 %v27, 4294901760
    %1057 = vmatpush1.msra.mxu0 %v1056
    %1058 = vmatprep.subr.mxu0 0.0
    %v1059 = vand.u32 %v28, 4294901760
    %1060 = vmatpush1.msra.mxu0 %v1059
    %1061 = vmatprep.subr.mxu0 0.0
    %v1062 = vand.u32 %v29, 4294901760
    %1063 = vmatpush1.msra.mxu0 %v1062
    %1064 = vmatprep.subr.mxu0 0.0
    %v1065 = vand.u32 %v30, 4294901760
    %1066 = vmatpush1.msra.mxu0 %v1065
    %1067 = vmatprep.subr.mxu0 0.0
    %1068 = vmatpush1.msra.mxu0 0.0
    %1069 = vmatprep.subr.mxu0 0.0
    %1070 = vmatpush1.msra.mxu0 0.0
    %1071 = vmatprep.subr.mxu0 0.0
    %1072 = vmatpush1.msra.mxu0 0.0
    %1073 = vmatprep.subr.mxu0 0.0
    %1074 = vmatpush1.msra.mxu0 0.0
    %1075 = vmatprep.subr.mxu0 0.0
    %1076 = vmatpush1.msra.mxu0 0.0
    %1077 = vmatprep.subr.mxu0 0.0
    %1078 = vmatpush1.msra.mxu0 0.0
    %1079 = vmatprep.subr.mxu0 0.0
    %1080 = vmatpush1.msra.mxu0 0.0
    %1081 = vmatprep.subr.mxu0 0.0
    %1082 = vmatpush1.msra.mxu0 0.0
    %1083 = vmatprep.subr.mxu0 0.0
    %1084 = vmatpush1.msra.mxu0 0.0
    %1085 = vmatprep.subr.mxu0 0.0
    %1086 = vmatpush1.msra.mxu0 0.0
    %1087 = vmatprep.subr.mxu0 0.0
    %1088 = vmatpush1.msra.mxu0 0.0
    %1089 = vmatprep.subr.mxu0 0.0
    %1090 = vmatpush1.msra.mxu0 0.0
    %1091 = vmatprep.subr.mxu0 0.0
    %1092 = vmatpush1.msra.mxu0 0.0
    %1093 = vmatprep.subr.mxu0 0.0
    %1094 = vmatpush1.msra.mxu0 0.0
    %1095 = vmatprep.subr.mxu0 0.0
    %1096 = vmatpush1.msra.mxu0 0.0
    %1097 = vmatprep.subr.mxu0 0.0
    %1098 = vmatpush1.msra.mxu0 0.0
    %1099 = vmatprep.mubr.f32.mxu0 0.0
    %v1100 = vand.u32 %v672, 4294901760
    %v1101 = vsub.f32 %v672, %v1100
    %v1102 = vand.u32 %v1101, 4294901760
    %1103 = vmatmul.mubr.f32.gmra.mrb[0].mxu0 %v1102
    %v1104 = vpop.f32.mrb[0].mxu0
    %v1105 = vadd.f32 %v1016, %v1104
    %v1106 = vpop.f32.mrb[0].mxu0
    %1107 = vdwg.mxu0
    %1108 = vmatprep.subr.mxu0 0.0
    %v1109 = vand.u32 %v15, 4294901760
    %v1110 = vsub.f32 %v15, %v1109
    %v1111 = vand.u32 %v1110, 4294901760
    %1112 = vmatpush1.msra.mxu0 %v1111
    %1113 = vmatprep.subr.mxu0 0.0
    %v1114 = vand.u32 %v16, 4294901760
    %v1115 = vsub.f32 %v16, %v1114
    %v1116 = vand.u32 %v1115, 4294901760
    %1117 = vmatpush1.msra.mxu0 %v1116
    %1118 = vmatprep.subr.mxu0 0.0
    %v1119 = vand.u32 %v17, 4294901760
    %v1120 = vsub.f32 %v17, %v1119
    %v1121 = vand.u32 %v1120, 4294901760
    %1122 = vmatpush1.msra.mxu0 %v1121
    %1123 = vmatprep.subr.mxu0 0.0
    %v1124 = vand.u32 %v18, 4294901760
    %v1125 = vsub.f32 %v18, %v1124
    %v1126 = vand.u32 %v1125, 4294901760
    %1127 = vmatpush1.msra.mxu0 %v1126
    %1128 = vmatprep.subr.mxu0 0.0
    %v1129 = vand.u32 %v19, 4294901760
    %v1130 = vsub.f32 %v19, %v1129
    %v1131 = vand.u32 %v1130, 4294901760
    %1132 = vmatpush1.msra.mxu0 %v1131
    %1133 = vmatprep.subr.mxu0 0.0
    %v1134 = vand.u32 %v20, 4294901760
    %v1135 = vsub.f32 %v20, %v1134
    %v1136 = vand.u32 %v1135, 4294901760
    %1137 = vmatpush1.msra.mxu0 %v1136
    %1138 = vmatprep.subr.mxu0 0.0
    %v1139 = vand.u32 %v21, 4294901760
    %v1140 = vsub.f32 %v21, %v1139
    %v1141 = vand.u32 %v1140, 4294901760
    %1142 = vmatpush1.msra.mxu0 %v1141
    %1143 = vmatprep.subr.mxu0 0.0
    %v1144 = vand.u32 %v22, 4294901760
    %v1145 = vsub.f32 %v22, %v1144
    %v1146 = vand.u32 %v1145, 4294901760
    %1147 = vmatpush1.msra.mxu0 %v1146
    %1148 = vmatprep.subr.mxu0 0.0
    %v1149 = vand.u32 %v23, 4294901760
    %v1150 = vsub.f32 %v23, %v1149
    %v1151 = vand.u32 %v1150, 4294901760
    %1152 = vmatpush1.msra.mxu0 %v1151
    %1153 = vmatprep.subr.mxu0 0.0
    %v1154 = vand.u32 %v24, 4294901760
    %v1155 = vsub.f32 %v24, %v1154
    %v1156 = vand.u32 %v1155, 4294901760
    %1157 = vmatpush1.msra.mxu0 %v1156
    %1158 = vmatprep.subr.mxu0 0.0
    %v1159 = vand.u32 %v25, 4294901760
    %v1160 = vsub.f32 %v25, %v1159
    %v1161 = vand.u32 %v1160, 4294901760
    %1162 = vmatpush1.msra.mxu0 %v1161
    %1163 = vmatprep.subr.mxu0 0.0
    %v1164 = vand.u32 %v26, 4294901760
    %v1165 = vsub.f32 %v26, %v1164
    %v1166 = vand.u32 %v1165, 4294901760
    %1167 = vmatpush1.msra.mxu0 %v1166
    %1168 = vmatprep.subr.mxu0 0.0
    %v1169 = vand.u32 %v27, 4294901760
    %v1170 = vsub.f32 %v27, %v1169
    %v1171 = vand.u32 %v1170, 4294901760
    %1172 = vmatpush1.msra.mxu0 %v1171
    %1173 = vmatprep.subr.mxu0 0.0
    %v1174 = vand.u32 %v28, 4294901760
    %v1175 = vsub.f32 %v28, %v1174
    %v1176 = vand.u32 %v1175, 4294901760
    %1177 = vmatpush1.msra.mxu0 %v1176
    %1178 = vmatprep.subr.mxu0 0.0
    %v1179 = vand.u32 %v29, 4294901760
    %v1180 = vsub.f32 %v29, %v1179
    %v1181 = vand.u32 %v1180, 4294901760
    %1182 = vmatpush1.msra.mxu0 %v1181
    %1183 = vmatprep.subr.mxu0 0.0
    %v1184 = vand.u32 %v30, 4294901760
    %v1185 = vsub.f32 %v30, %v1184
    %v1186 = vand.u32 %v1185, 4294901760
    %1187 = vmatpush1.msra.mxu0 %v1186
    %1188 = vmatprep.subr.mxu0 0.0
    %1189 = vmatpush1.msra.mxu0 0.0
    %1190 = vmatprep.subr.mxu0 0.0
    %1191 = vmatpush1.msra.mxu0 0.0
    %1192 = vmatprep.subr.mxu0 0.0
    %1193 = vmatpush1.msra.mxu0 0.0
    %1194 = vmatprep.subr.mxu0 0.0
    %1195 = vmatpush1.msra.mxu0 0.0
    %1196 = vmatprep.subr.mxu0 0.0
    %1197 = vmatpush1.msra.mxu0 0.0
    %1198 = vmatprep.subr.mxu0 0.0
    %1199 = vmatpush1.msra.mxu0 0.0
    %1200 = vmatprep.subr.mxu0 0.0
    %1201 = vmatpush1.msra.mxu0 0.0
    %1202 = vmatprep.subr.mxu0 0.0
    %1203 = vmatpush1.msra.mxu0 0.0
    %1204 = vmatprep.subr.mxu0 0.0
    %1205 = vmatpush1.msra.mxu0 0.0
    %1206 = vmatprep.subr.mxu0 0.0
    %1207 = vmatpush1.msra.mxu0 0.0
    %1208 = vmatprep.subr.mxu0 0.0
    %1209 = vmatpush1.msra.mxu0 0.0
    %1210 = vmatprep.subr.mxu0 0.0
    %1211 = vmatpush1.msra.mxu0 0.0
    %1212 = vmatprep.subr.mxu0 0.0
    %1213 = vmatpush1.msra.mxu0 0.0
    %1214 = vmatprep.subr.mxu0 0.0
    %1215 = vmatpush1.msra.mxu0 0.0
    %1216 = vmatprep.subr.mxu0 0.0
    %1217 = vmatpush1.msra.mxu0 0.0
    %1218 = vmatprep.subr.mxu0 0.0
    %1219 = vmatpush1.msra.mxu0 0.0
    %1220 = vmatprep.mubr.f32.mxu0 0.0
    %v1221 = vand.u32 %v672, 4294901760
    %1222 = vmatmul.mubr.f32.gmra.mrb[0].mxu0 %v1221
    %v1223 = vpop.f32.mrb[0].mxu0
    %v1224 = vadd.f32 %v1105, %v1223
    %v1225 = vpop.f32.mrb[0].mxu0
    %1226 = vdwg.mxu0
    %1227 = vmatprep.subr.mxu0 0.0
    %v1228 = vand.u32 %v15, 4294901760
    %1229 = vmatpush1.msra.mxu0 %v1228
    %1230 = vmatprep.subr.mxu0 0.0
    %v1231 = vand.u32 %v16, 4294901760
    %1232 = vmatpush1.msra.mxu0 %v1231
    %1233 = vmatprep.subr.mxu0 0.0
    %v1234 = vand.u32 %v17, 4294901760
    %1235 = vmatpush1.msra.mxu0 %v1234
    %1236 = vmatprep.subr.mxu0 0.0
    %v1237 = vand.u32 %v18, 4294901760
    %1238 = vmatpush1.msra.mxu0 %v1237
    %1239 = vmatprep.subr.mxu0 0.0
    %v1240 = vand.u32 %v19, 4294901760
    %1241 = vmatpush1.msra.mxu0 %v1240
    %1242 = vmatprep.subr.mxu0 0.0
    %v1243 = vand.u32 %v20, 4294901760
    %1244 = vmatpush1.msra.mxu0 %v1243
    %1245 = vmatprep.subr.mxu0 0.0
    %v1246 = vand.u32 %v21, 4294901760
    %1247 = vmatpush1.msra.mxu0 %v1246
    %1248 = vmatprep.subr.mxu0 0.0
    %v1249 = vand.u32 %v22, 4294901760
    %1250 = vmatpush1.msra.mxu0 %v1249
    %1251 = vmatprep.subr.mxu0 0.0
    %v1252 = vand.u32 %v23, 4294901760
    %1253 = vmatpush1.msra.mxu0 %v1252
    %1254 = vmatprep.subr.mxu0 0.0
    %v1255 = vand.u32 %v24, 4294901760
    %1256 = vmatpush1.msra.mxu0 %v1255
    %1257 = vmatprep.subr.mxu0 0.0
    %v1258 = vand.u32 %v25, 4294901760
    %1259 = vmatpush1.msra.mxu0 %v1258
    %1260 = vmatprep.subr.mxu0 0.0
    %v1261 = vand.u32 %v26, 4294901760
    %1262 = vmatpush1.msra.mxu0 %v1261
    %1263 = vmatprep.subr.mxu0 0.0
    %v1264 = vand.u32 %v27, 4294901760
    %1265 = vmatpush1.msra.mxu0 %v1264
    %1266 = vmatprep.subr.mxu0 0.0
    %v1267 = vand.u32 %v28, 4294901760
    %1268 = vmatpush1.msra.mxu0 %v1267
    %1269 = vmatprep.subr.mxu0 0.0
    %v1270 = vand.u32 %v29, 4294901760
    %1271 = vmatpush1.msra.mxu0 %v1270
    %1272 = vmatprep.subr.mxu0 0.0
    %v1273 = vand.u32 %v30, 4294901760
    %1274 = vmatpush1.msra.mxu0 %v1273
    %1275 = vmatprep.subr.mxu0 0.0
    %1276 = vmatpush1.msra.mxu0 0.0
    %1277 = vmatprep.subr.mxu0 0.0
    %1278 = vmatpush1.msra.mxu0 0.0
    %1279 = vmatprep.subr.mxu0 0.0
    %1280 = vmatpush1.msra.mxu0 0.0
    %1281 = vmatprep.subr.mxu0 0.0
    %1282 = vmatpush1.msra.mxu0 0.0
    %1283 = vmatprep.subr.mxu0 0.0
    %1284 = vmatpush1.msra.mxu0 0.0
    %1285 = vmatprep.subr.mxu0 0.0
    %1286 = vmatpush1.msra.mxu0 0.0
    %1287 = vmatprep.subr.mxu0 0.0
    %1288 = vmatpush1.msra.mxu0 0.0
    %1289 = vmatprep.subr.mxu0 0.0
    %1290 = vmatpush1.msra.mxu0 0.0
    %1291 = vmatprep.subr.mxu0 0.0
    %1292 = vmatpush1.msra.mxu0 0.0
    %1293 = vmatprep.subr.mxu0 0.0
    %1294 = vmatpush1.msra.mxu0 0.0
    %1295 = vmatprep.subr.mxu0 0.0
    %1296 = vmatpush1.msra.mxu0 0.0
    %1297 = vmatprep.subr.mxu0 0.0
    %1298 = vmatpush1.msra.mxu0 0.0
    %1299 = vmatprep.subr.mxu0 0.0
    %1300 = vmatpush1.msra.mxu0 0.0
    %1301 = vmatprep.subr.mxu0 0.0
    %1302 = vmatpush1.msra.mxu0 0.0
    %1303 = vmatprep.subr.mxu0 0.0
    %1304 = vmatpush1.msra.mxu0 0.0
    %1305 = vmatprep.subr.mxu0 0.0
    %1306 = vmatpush1.msra.mxu0 0.0
    %1307 = vmatprep.mubr.f32.mxu0 0.0
    %v1308 = vand.u32 %v672, 4294901760
    %1309 = vmatmul.mubr.f32.gmra.mrb[0].mxu0 %v1308
    %v1310 = vpop.f32.mrb[0].mxu0
    %v1311 = vadd.f32 %v1224, %v1310
    %v1312 = vpop.f32.mrb[0].mxu0
    %1313 = vdwg.mxu0
    %v1314 = vmul.f32 %v669, %v669
    %v1315 = vsub.f32 %v1311, %v1314
    %v1316 = vld [vmem:[%s1] sm:$0x1]
    %v1317 = vld [vmem:[%s1 + $0x1] sm:$0x1]
    %v1318 = vsub.f32 %v14, %v669
    %v1319 = vadd.f32 %v1315, 1e-05
    %v1320 = vrsqrt.pop %v1319
    %v1321 = vmul.f32 %v1318, %v1320
    %v1322 = vlaneseq
    %v1323 = vshrl.u32 %v1322, 7
    %v1324 = vsub.s32 0, %v1323
    %v1325 = vrot.slane %v1316, %v1324
    %v1326 = vmul.f32 %v1321, %v1325
    %v1327 = vlaneseq
    %v1328 = vshrl.u32 %v1327, 7
    %v1329 = vsub.s32 0, %v1328
    %v1330 = vrot.slane %v1317, %v1329
    %v1331 = vadd.f32 %v1326, %v1330
    %1332 = vst [vmem:[#allocation2] sm:$0xff] %v1331
    // Predicated region
    $region14: #{layer_norm_pallas.1} parent=1 // pred_check
      _
    $region15: #{layer_norm_pallas.1} parent=1 // pred_check_branch
      %1334 = sbr.rel (0) target = $region17
    $region16: #{layer_norm_pallas.1} parent=1 // pred_region
      // Predicated region
      $region18: #{layer_norm_pallas.1} parent=16 // pred_check
        _
      $region19: #{layer_norm_pallas.1} parent=16 // pred_check_branch
        %1336 = sbr.rel (0) target = $region21
      $region20: #{layer_norm_pallas.1} parent=16 // pred_region
        // Predicated region
        $region22: #{layer_norm_pallas.1} parent=20 // pred_check
          _
        $region23: #{layer_norm_pallas.1} parent=20 // pred_check_branch
          %1338 = sbr.rel target = $region25
        $region24: #{layer_norm_pallas.1} parent=20 // pred_region
          // Predicated region
          $region37: #{layer_norm_pallas.1} parent=24 // pred_check
            _
          $region38: #{layer_norm_pallas.1} parent=24 // pred_check_branch
            %1353 = sbr.rel (0) target = $region40
          $region39: #{layer_norm_pallas.1} parent=24 // pred_region
            loop: start=0, step=1, limit=1
            $region41: #{layer_norm_pallas.1} parent=39 // loop_pre_header
              _
            $region42: #{layer_norm_pallas.1} parent=39 // loop_header
              %s1356 = sphi 0, %s1360
              %p1357 = scmp.ge.s32.totalorder %s1356, 1
              %s1361 = sphi [#allocation2], [#allocation2]
              %s1362 = sphi %s3, %s3
            $region43: #{layer_norm_pallas.1} parent=39 // loop_header_branch
              %1359 = sbr.rel (%p1357) target = $region47
            $region44: #{layer_norm_pallas.1} parent=39 // loop_body
              %v1363 = vld [vmem:[%s1361] sm:$0xf]
              %1364 = vst [vmem:[%s1362] sm:$0xf] %v1363
            $region45: #{layer_norm_pallas.1} parent=39 // loop_footer
              %s1360 = sadd.s32 1, %s1356
            $region46: #{layer_norm_pallas.1} parent=39 // loop_footer_branch
              %1355 = sbr.rel target = $region42
            $region47: #{layer_norm_pallas.1} parent=39 // loop_exit
              _
          $region40: #{layer_norm_pallas.1} parent=24 // pred_fallthru
            _
        $region25: #{layer_norm_pallas.1} parent=20 // pred_fallthru
          _
        // Predicated region
        $region26: #{layer_norm_pallas.1} parent=20 // pred_check
          _
        $region27: #{layer_norm_pallas.1} parent=20 // pred_check_branch
          %1340 = sbr.rel (0) target = $region29
        $region28: #{layer_norm_pallas.1} parent=20 // pred_region
          loop: start=0, step=1, limit=1
          $region30: #{layer_norm_pallas.1} parent=28 // loop_pre_header
            _
          $region31: #{layer_norm_pallas.1} parent=28 // loop_header
            %s1343 = sphi 0, %s1347
            %p1344 = scmp.ge.s32.totalorder %s1343, 1
            %s1348 = sphi [#allocation2], [#allocation2]
            %s1349 = sphi %s3, %s3
          $region32: #{layer_norm_pallas.1} parent=28 // loop_header_branch
            %1346 = sbr.rel (%p1344) target = $region36
          $region33: #{layer_norm_pallas.1} parent=28 // loop_body
            %v1350 = vld [vmem:[%s1348] sm:$0xf]
            %1351 = vst [vmem:[%s1349] sm:$0xf] %v1350
          $region34: #{layer_norm_pallas.1} parent=28 // loop_footer
            %s1347 = sadd.s32 1, %s1343
          $region35: #{layer_norm_pallas.1} parent=28 // loop_footer_branch
            %1342 = sbr.rel target = $region31
          $region36: #{layer_norm_pallas.1} parent=28 // loop_exit
            _
        $region29: #{layer_norm_pallas.1} parent=20 // pred_fallthru
          _
      $region21: #{layer_norm_pallas.1} parent=16 // pred_fallthru
        _
      %1365 = vnop
    $region17: #{layer_norm_pallas.1} parent=1 // pred_fallthru
      _
    // Predicated region
    $region48: #{layer_norm_pallas.1} parent=1 // pred_check
      _
    $region49: #{layer_norm_pallas.1} parent=1 // pred_check_branch
      %1367 = sbr.rel (0) target = $region51
    $region50: #{layer_norm_pallas.1} parent=1 // pred_region
      _
    $region51: #{layer_norm_pallas.1} parent=1 // pred_fallthru
      _

</llo_original>
